<compile_context>
chip_gen: v5e
topology: v5e:2x2
jax: 0.10.0
libtpu: 0.0.40
codegen_flags: <defaults>
</compile_context>

<pallas_src>
import functools
import math

import numpy as np
import jax
import jax.numpy as jnp
from jax import lax
from jax.experimental import pallas as pl
from jax.experimental.pallas import tpu as pltpu

INF = 1000000000.0
_LOG_EPS = float(math.log(1e-8))   # floor of the reference's (x + 1e-8).log()


# ----------------------------------------------------------------------------
# Pallas kernel: per-(image, HW-tile) cost block of shape (T_pad, hw_tile)
# ----------------------------------------------------------------------------
def _cost_kernel(inv_size_ref, onehot_ref, tgt_xy_ref, logits_ref, points_ref,
                 mask_ref, cost_ref, *, cost_class_w, cost_point_w, alpha,
                 gamma, gather_first):
    # inv_size_ref: (bs, 2)        SMEM, per-image 1/image_size
    # onehot_ref  : (T_pad, K)     one-hot of (padded) target labels, f32
    # tgt_xy_ref  : (T_pad, 2)     normalized target points, f32
    # logits_ref  : (K, hw_tile)   raw logits, NATIVE dtype, channel-first
    # points_ref  : (2, hw_tile)   predicted points, NATIVE dtype, un-normalized
    # mask_ref    : (1, hw_tile)   tr_train_masks, NATIVE dtype
    # cost_ref    : (T_pad, hw_tile) output cost block, f32
    b = pl.program_id(0)

    def focal(lt):
        # lt: f32 logits. One sigmoid + ONE log per element:
        #   log(1-p) == log(p) - lt  (exact for p = sigmoid(lt));
        # clamped to the reference's log(1e-8) floor for saturated logits.
        p = jax.nn.sigmoid(lt)
        log_p = jnp.log(p + 1e-8)                       # == reference pos term
        log_1mp = jnp.maximum(log_p - lt, _LOG_EPS)     # ~= log(1 - p + 1e-8)
        if gamma == 2:
            pg, qg = p * p, (1.0 - p) * (1.0 - p)
        else:
            pg, qg = p ** gamma, (1.0 - p) ** gamma
        neg = (1.0 - alpha) * pg * (-log_1mp)
        pos = alpha * qg * (-log_p)
        return pos - neg

    if gather_first:
        # Each one-hot row selects exactly one class, so gathering commutes
        # with the element-wise focal math: gather logits first (cheap MXU
        # matmul), then run the EUP-heavy math on the small (T_pad, hw) tile.
        if logits_ref.dtype == jnp.float32:
            lt = jnp.dot(onehot_ref[...], logits_ref[...],
                         preferred_element_type=jnp.float32,
                         precision=lax.Precision.HIGHEST)
        else:
            # bf16 x {0,1} one-hot through the MXU is exact.
            lt = jnp.dot(onehot_ref[...].astype(logits_ref.dtype),
                         logits_ref[...],
                         preferred_element_type=jnp.float32)
        cost_class = focal(lt)                                   # (T_pad, hw)
    else:
        fc = focal(logits_ref[...].astype(jnp.float32))          # (K, hw)
        cost_class = jnp.dot(onehot_ref[...], fc,
                             preferred_element_type=jnp.float32,
                             precision=lax.Precision.HIGHEST)    # (T_pad, hw)

    # L1 cdist between targets (T_pad, 2) and normalized predictions.
    inv_x = inv_size_ref[b, 0]
    inv_y = inv_size_ref[b, 1]
    px = points_ref[0:1, :].astype(jnp.float32) * inv_x          # (1, hw)
    py = points_ref[1:2, :].astype(jnp.float32) * inv_y          # (1, hw)
    tx = tgt_xy_ref[:, 0:1]                                      # (T_pad, 1)
    ty = tgt_xy_ref[:, 1:2]                                      # (T_pad, 1)
    cost_po = jnp.abs(tx - px) + jnp.abs(ty - py)                # (T_pad, hw)

    c = cost_class_w * cost_class + cost_point_w * cost_po
    # Reference sets C[pred_row] = INF where mask <= 0; preds are columns here.
    cost_ref[...] = jnp.where(mask_ref[...] <= 0, INF, c)


def _pick_hw_tile(hw, K, T_pad, logit_bytes, *, vmem_budget_bytes=10 << 20,
                  max_tile=2048):
    """VMEM-budgeted HW tile: full axis if small, else a multiple of 128 sized
    so the double-buffered streamed blocks stay under `vmem_budget_bytes`."""
    # Double-buffered bytes per HW column: logits + points + mask + output.
    per_col = 2 * (K * logit_bytes + 2 * 4 + 4 + T_pad * 4)
    t = min(int(max_tile), int(vmem_budget_bytes // max(per_col, 1)))
    t = max((t // 128) * 128, 128)
    return hw if hw <= t else t


# ----------------------------------------------------------------------------
# Batched cost-matrix computation: ONE pallas_call for the whole batch.
# ----------------------------------------------------------------------------
def compute_cost_matrices(pred_logits, pred_points, tr_train_masks, targets, *,
                          cost_class=1.0, cost_point=1.0, focal_alpha=0.25,
                          focal_gamma=2, max_hw_tile=2048):
    """Returns (C_all, num_tgts, T_pad) with C_all: (bs, T_pad, HW) float32."""
    bs, K, HW = pred_logits.shape
    num_tgts = [int(t['labels'].shape[0]) for t in targets]
    T_max = max(max(num_tgts), 1)
    # Bucket T_pad (power of two, >= 8): varying batch-max target counts reuse
    # the same compiled kernel instead of triggering a fresh Mosaic compile.
    T_pad = max(8, int(pl.next_power_of_2(T_max)))

    # Tiny per-target metadata -> padded batch arrays (host-side, done once).
    onehot = np.zeros((bs, T_pad, K), np.float32)
    tgt_xy = np.zeros((bs, T_pad, 2), np.float32)
    inv_size = np.ones((bs, 2), np.float32)
    for i, t in enumerate(targets):
        ti = num_tgts[i]
        if ti == 0:
            continue
        img = np.asarray(t['image_size'], np.float32)
        inv_size[i] = 1.0 / img
        ids = np.asarray(t['labels']).astype(np.int64)
        onehot[i, np.arange(ti), ids] = 1.0
        tgt_xy[i, :ti] = np.asarray(t['points'], np.float32) / img

    # Native-dtype streams: no astype / divide in front of the pallas_call.
    logits = pred_logits                          # (bs, K, HW) native dtype
    points = pred_points                          # (bs, 2, HW) native dtype
    mask = tr_train_masks.reshape(bs, 1, HW)      # free layout-preserving view

    hw_tile = _pick_hw_tile(HW, K, T_pad, pred_logits.dtype.itemsize,
                            max_tile=max_hw_tile)
    n_hw = int(pl.cdiv(HW, hw_tile))
    # Make sure there are >= 2 grid points so both v7x TensorCores get work.
    if bs * n_hw < 2 and HW >= 256:
        hw_tile = max(128, (HW // 2 // 128) * 128)
        n_hw = int(pl.cdiv(HW, hw_tile))

    gather_first = T_pad < K
    kernel = functools.partial(
        _cost_kernel,
        cost_class_w=float(cost_class),
        cost_point_w=float(cost_point),
        alpha=float(focal_alpha),
        gamma=int(focal_gamma),
        gather_first=bool(gather_first))

    C_all = pl.pallas_call(
        kernel,
        out_shape=jax.ShapeDtypeStruct((bs, T_pad, HW), jnp.float32),
        grid=(bs, n_hw),
        in_specs=[
            pl.BlockSpec(memory_space=pltpu.MemorySpace.SMEM),          # inv_size
            pl.BlockSpec((None, T_pad, K), lambda b, h: (b, 0, 0)),     # onehot
            pl.BlockSpec((None, T_pad, 2), lambda b, h: (b, 0, 0)),     # tgt_xy
            pl.BlockSpec((None, K, hw_tile), lambda b, h: (b, 0, h)),   # logits
            pl.BlockSpec((None, 2, hw_tile), lambda b, h: (b, 0, h)),   # points
            pl.BlockSpec((None, 1, hw_tile), lambda b, h: (b, 0, h)),   # mask
        ],
        out_specs=pl.BlockSpec((None, T_pad, hw_tile), lambda b, h: (b, 0, h)),
        compiler_params=pltpu.CompilerParams(
            dimension_semantics=("parallel", "parallel"),
            vmem_limit_bytes=32 * 1024 * 1024),
    )(jnp.asarray(inv_size), jnp.asarray(onehot), jnp.asarray(tgt_xy),
      logits, points, mask)

    return C_all, num_tgts, T_pad


# ----------------------------------------------------------------------------
# Host-side Hungarian assignment (no Pallas equivalent — sequential algorithm)
# ----------------------------------------------------------------------------
# TODO(synk): linear_sum_assignment is inherently sequential/combinatorial; it
# runs on host over a single batched device->host cost-matrix transfer.
try:
    from scipy.optimize import linear_sum_assignment as _scipy_lsa
except Exception:  # pragma: no cover - scipy optional
    _scipy_lsa = None


def _linear_sum_assignment(cost):
    if _scipy_lsa is not None:
        r, c = _scipy_lsa(np.asarray(cost, dtype=np.float64))
        return np.asarray(r, dtype=np.int64), np.asarray(c, dtype=np.int64)
    # Pure-numpy Jonker-Volgenant style fallback.
    cost = np.asarray(cost, dtype=np.float64)
    transposed = False
    if cost.shape[0] > cost.shape[1]:
        cost = cost.T
        transposed = True
    n, m = cost.shape  # n <= m
    u = np.zeros(n + 1)
    v = np.zeros(m + 1)
    p = np.zeros(m + 1, dtype=np.int64)
    way = np.zeros(m + 1, dtype=np.int64)
    for i in range(1, n + 1):
        p[0] = i
        j0 = 0
        minv = np.full(m + 1, np.inf)
        used = np.zeros(m + 1, dtype=bool)
        while True:
            used[j0] = True
            i0 = p[j0]
            delta = np.inf
            j1 = 0
            for j in range(1, m + 1):
                if not used[j]:
                    cur = cost[i0 - 1, j - 1] - u[i0] - v[j]
                    if cur < minv[j]:
                        minv[j] = cur
                        way[j] = j0
                    if minv[j] < delta:
                        delta = minv[j]
                        j1 = j
            for j in range(m + 1):
                if used[j]:
                    u[p[j]] += delta
                    v[j] -= delta
                else:
                    minv[j] -= delta
            j0 = j1
            if p[j0] == 0:
                break
        while j0:
            j1 = way[j0]
            p[j0] = p[j1]
            j0 = j1
    rows, cols = [], []
    for j in range(1, m + 1):
        if p[j] != 0:
            rows.append(p[j] - 1)
            cols.append(j - 1)
    rows = np.asarray(rows, dtype=np.int64)
    cols = np.asarray(cols, dtype=np.int64)
    if transposed:
        rows, cols = cols, rows
    order = np.argsort(rows)
    return rows[order], cols[order]


# ----------------------------------------------------------------------------
# Full matcher (mirrors MinCostMatcher.forward)
# ----------------------------------------------------------------------------
def min_cost_matcher(outputs, targets, cost_class=1.0, cost_point=1.0,
                     focal_alpha=0.25, focal_gamma=2):
    pred_logits = outputs['pred_logits']        # (bs, K, HW)
    pred_points = outputs['pred_points']        # (bs, 2, HW)
    tr_train_masks = outputs['tr_train_masks']  # (bs, HW)
    bs = pred_logits.shape[0]

    num_tgts = [int(t['labels'].shape[0]) for t in targets]
    empty = (np.zeros(0, np.int64), np.zeros(0, np.int64))
    if max(num_tgts, default=0) == 0:
        return [empty for _ in range(bs)]

    C_all, num_tgts, T_pad = compute_cost_matrices(
        pred_logits, pred_points, tr_train_masks, targets,
        cost_class=cost_class, cost_point=cost_point,
        focal_alpha=focal_alpha, focal_gamma=focal_gamma)

    # Shrink the device->host transfer: drop bucket-padding rows on device.
    # TODO(synk): could downcast to bf16 for D2H if Hungarian tie-breaking
    # tolerates the cost scale; kept f32 for bit-faithful assignment.
    T_max = max(num_tgts)
    C_dev = C_all if T_pad == T_max else C_all[:, :T_max, :]
    C_host = np.asarray(jax.block_until_ready(C_dev))

    indices = []
    for i in range(bs):
        ti = num_tgts[i]
        if ti == 0:
            indices.append(empty)
            continue
        # Slice off padded target rows; transpose to (HW, T) like the reference.
        C_i = C_host[i, :ti, :].T
        src_ind, tgt_ind = _linear_sum_assignment(C_i)
        indices.append((src_ind.astype(np.int64), tgt_ind.astype(np.int64)))
    return indices


# ----------------------------------------------------------------------------
# Reference (numpy) cost matrix for a correctness check of the kernel
# ----------------------------------------------------------------------------
def _ref_cost_matrix(logits_i, points_i, tgt_ids, tgt_points, img_size,
                     tr_mask_i, cost_class=1.0, cost_point=1.0,
                     alpha=0.25, gamma=2):
    logits_i = np.asarray(logits_i, np.float32)
    out_prob = 1.0 / (1.0 + np.exp(-logits_i.T))                 # (HW, K)
    out_po = np.asarray(points_i, np.float32).T / np.asarray(img_size, np.float32)
    tgt_po = np.asarray(tgt_points, np.float32) / np.asarray(img_size, np.float32)
    cost_po = np.abs(out_po[:, None, :] - tgt_po[None, :, :]).sum(-1)
    neg = (1 - alpha) * out_prob ** gamma * -np.log(1 - out_prob + 1e-8)
    pos = alpha * (1 - out_prob) ** gamma * -np.log(out_prob + 1e-8)
    tgt_ids = np.asarray(tgt_ids)
    cls = pos[:, tgt_ids] - neg[:, tgt_ids]
    C = cost_class * cls + cost_point * cost_po
    C[np.asarray(tr_mask_i) <= 0] = INF
    return C


def _make_case(key, bs, K, HW, T):
    k1, k2, k3, k4, k5 = jax.random.split(key, 5)
    pred_logits = jax.random.normal(k1, (bs, K, HW), dtype=jnp.float32)
    pred_points = jax.random.uniform(k2, (bs, 2, HW), dtype=jnp.float32,
                                     minval=0.0, maxval=640.0)
    tr_train_masks = jax.random.uniform(k3, (bs, HW), dtype=jnp.float32,
                                        minval=-1.0, maxval=1.0)
    targets = []
    tk = jax.random.split(k4, bs)
    pk = jax.random.split(k5, bs)
    for i in range(bs):
        labels = jax.random.randint(tk[i], (T,), 0, K, dtype=jnp.int32)
        points = jax.random.uniform(pk[i], (T, 2), dtype=jnp.float32,
                                    minval=0.0, maxval=640.0)
        image_size = jnp.asarray([640.0, 640.0], dtype=jnp.float32)
        targets.append({'labels': labels, 'points': points,
                        'image_size': image_size})
    outputs = {'pred_logits': pred_logits, 'pred_points': pred_points,
               'tr_train_masks': tr_train_masks}
    return outputs, targets


def _check_case(outputs, targets, T, max_hw_tile=2048):
    C_all, num_tgts, _ = compute_cost_matrices(
        outputs['pred_logits'], outputs['pred_points'],
        outputs['tr_train_masks'], targets, max_hw_tile=max_hw_tile)
    C_host = np.asarray(jax.block_until_ready(C_all))
    for i in range(outputs['pred_logits'].shape[0]):
        C_ref = _ref_cost_matrix(
            outputs['pred_logits'][i], outputs['pred_points'][i],
            targets[i]['labels'], targets[i]['points'],
            targets[i]['image_size'], outputs['tr_train_masks'][i])
        np.testing.assert_allclose(C_host[i, :T, :].T, C_ref,
                                   rtol=1e-4, atol=1e-4)


if __name__ == "__main__":
    key = jax.random.PRNGKey(0)
    k_main, k_alt, k_rag = jax.random.split(key, 3)

    # Case 1 (K <= T_pad -> focal-first branch): bs=2, K=4, HW=64, T=5.
    bs, K, H, W, T = 2, 4, 8, 8, 5
    HW = H * W
    outputs, targets = _make_case(k_main, bs, K, HW, T)
    _check_case(outputs, targets, T)

    # Case 2 exercising the gather-before-focal branch (T_pad < K).
    K2, T2 = 16, 3
    outputs2, targets2 = _make_case(k_alt, bs, K2, HW, T2)
    _check_case(outputs2, targets2, T2)

    # Case 3 exercising the cdiv grid with a ragged last HW block
    # (HW=192, tile=128 -> 2 blocks, last one partial).
    outputs3, targets3 = _make_case(k_rag, bs, K, 192, T)
    _check_case(outputs3, targets3, T, max_hw_tile=128)

    # Full matcher (batched kernel + single trimmed transfer + host Hungarian).
    indices = min_cost_matcher(outputs, targets)
    for src, tgt in indices:
        assert src.shape == (T,) and tgt.shape == (T,)
        assert len(set(src.tolist())) == T and len(set(tgt.tolist())) == T

    print("KERNEL_OK")
</pallas_src>

<mosaic_0001>
module attributes {stable_mosaic.version = 11 : i64} {
  func.func @_cost_kernel(%arg0: i32, %arg1: i32, %arg2: memref<2x2xf32, #tpu.memory_space<smem>>, %arg3: memref<1x8x4xf32, #tpu.memory_space<vmem>>, %arg4: memref<1x8x2xf32, #tpu.memory_space<vmem>>, %arg5: memref<1x4x64xf32, #tpu.memory_space<vmem>>, %arg6: memref<1x2x64xf32, #tpu.memory_space<vmem>>, %arg7: memref<1x1x64xf32, #tpu.memory_space<vmem>>, %arg8: memref<1x8x64xf32, #tpu.memory_space<vmem>>) attributes {dimension_semantics = [#tpu.dimension_semantics<parallel>, #tpu.dimension_semantics<parallel>], iteration_bounds = array<i64: 2, 1>, scalar_prefetch = 0 : i64, scratch_operands = 0 : i64, tpu.core_type = #tpu.core_type<tc>, window_params = [{transform_indices = @transform_0, window_bounds = array<i64: 2, 2>}, {transform_indices = @transform_1, window_bounds = array<i64: 1, 8, 4>}, {transform_indices = @transform_2, window_bounds = array<i64: 1, 8, 2>}, {transform_indices = @transform_3, window_bounds = array<i64: 1, 4, 64>}, {transform_indices = @transform_4, window_bounds = array<i64: 1, 2, 64>}, {transform_indices = @transform_5, window_bounds = array<i64: 1, 1, 64>}, {transform_indices = @transform_6, window_bounds = array<i64: 1, 8, 64>}]} {
    %c0 = arith.constant 0 : index
    %c0_0 = arith.constant 0 : index
    %c0_1 = arith.constant 0 : index
    %0 = vector.load %arg5[%c0, %c0_0, %c0_1] : memref<1x4x64xf32, #tpu.memory_space<vmem>>, vector<1x4x64xf32>
    %1 = vector.shape_cast %0 : vector<1x4x64xf32> to vector<4x64xf32>
    %2 = arith.negf %1 : vector<4x64xf32>
    %3 = math.exp %2 : vector<4x64xf32>
    %cst = arith.constant 1.000000e+00 : f32
    %4 = vector.broadcast %cst : f32 to vector<4x64xf32>
    %5 = arith.addf %4, %3 : vector<4x64xf32>
    %6 = arith.divf %4, %5 : vector<4x64xf32>
    %cst_2 = arith.constant 9.99999993E-9 : f32
    %7 = vector.broadcast %cst_2 : f32 to vector<4x64xf32>
    %8 = arith.addf %6, %7 : vector<4x64xf32>
    %9 = math.log %8 : vector<4x64xf32>
    %10 = arith.subf %9, %1 : vector<4x64xf32>
    %cst_3 = arith.constant -18.420681 : f32
    %11 = vector.broadcast %cst_3 : f32 to vector<4x64xf32>
    %12 = arith.maximumf %10, %11 : vector<4x64xf32>
    %13 = arith.mulf %6, %6 : vector<4x64xf32>
    %cst_4 = arith.constant 1.000000e+00 : f32
    %14 = vector.broadcast %cst_4 : f32 to vector<4x64xf32>
    %15 = arith.subf %14, %6 : vector<4x64xf32>
    %cst_5 = arith.constant 1.000000e+00 : f32
    %16 = vector.broadcast %cst_5 : f32 to vector<4x64xf32>
    %17 = arith.subf %16, %6 : vector<4x64xf32>
    %18 = arith.mulf %15, %17 : vector<4x64xf32>
    %cst_6 = arith.constant 7.500000e-01 : f32
    %19 = vector.broadcast %cst_6 : f32 to vector<4x64xf32>
    %20 = arith.mulf %19, %13 : vector<4x64xf32>
    %cst_7 = arith.constant 0.000000e+00 : f32
    %21 = vector.broadcast %cst_7 : f32 to vector<4x64xf32>
    %22 = arith.subf %21, %12 : vector<4x64xf32>
    %23 = arith.mulf %20, %22 : vector<4x64xf32>
    %cst_8 = arith.constant 2.500000e-01 : f32
    %24 = vector.broadcast %cst_8 : f32 to vector<4x64xf32>
    %25 = arith.mulf %24, %18 : vector<4x64xf32>
    %cst_9 = arith.constant 0.000000e+00 : f32
    %26 = vector.broadcast %cst_9 : f32 to vector<4x64xf32>
    %27 = arith.subf %26, %9 : vector<4x64xf32>
    %28 = arith.mulf %25, %27 : vector<4x64xf32>
    %29 = arith.subf %28, %23 : vector<4x64xf32>
    %c0_10 = arith.constant 0 : index
    %c0_11 = arith.constant 0 : index
    %c0_12 = arith.constant 0 : index
    %30 = vector.load %arg3[%c0_10, %c0_11, %c0_12] : memref<1x8x4xf32, #tpu.memory_space<vmem>>, vector<1x8x4xf32>
    %31 = vector.shape_cast %30 : vector<1x8x4xf32> to vector<8x4xf32>
    %cst_13 = arith.constant dense<0.000000e+00> : vector<8x64xf32>
    %32 = tpu.matmul %31, %29, %cst_13 {dimension_numbers = #tpu.dot_dimension_numbers<[1], [0], [0], [1], [0, 0, 1, 1], [], []>, precision = #tpu.contract_precision<fp32>} : vector<8x4xf32>, vector<4x64xf32>, vector<8x64xf32> -> vector<8x64xf32>
    %33 = arith.index_cast %arg0 : i32 to index
    %c0_14 = arith.constant 0 : index
    %34 = memref.load %arg2[%33, %c0_14] : memref<2x2xf32, #tpu.memory_space<smem>>
    %35 = arith.index_cast %arg0 : i32 to index
    %c1 = arith.constant 1 : index
    %36 = memref.load %arg2[%35, %c1] : memref<2x2xf32, #tpu.memory_space<smem>>
    %c0_15 = arith.constant 0 : index
    %c0_16 = arith.constant 0 : index
    %c0_17 = arith.constant 0 : index
    %37 = vector.load %arg6[%c0_15, %c0_16, %c0_17] : memref<1x2x64xf32, #tpu.memory_space<vmem>>, vector<1x1x64xf32>
    %38 = vector.shape_cast %37 : vector<1x1x64xf32> to vector<1x64xf32>
    %39 = vector.broadcast %34 : f32 to vector<1x64xf32>
    %40 = arith.mulf %38, %39 : vector<1x64xf32>
    %c0_18 = arith.constant 0 : index
    %c1_19 = arith.constant 1 : index
    %c0_20 = arith.constant 0 : index
    %41 = vector.load %arg6[%c0_18, %c1_19, %c0_20] : memref<1x2x64xf32, #tpu.memory_space<vmem>>, vector<1x1x64xf32>
    %42 = vector.shape_cast %41 : vector<1x1x64xf32> to vector<1x64xf32>
    %43 = vector.broadcast %36 : f32 to vector<1x64xf32>
    %44 = arith.mulf %42, %43 : vector<1x64xf32>
    %c0_21 = arith.constant 0 : index
    %c0_22 = arith.constant 0 : index
    %c0_23 = arith.constant 0 : index
    %45 = vector.load %arg4[%c0_21, %c0_22, %c0_23] : memref<1x8x2xf32, #tpu.memory_space<vmem>>, vector<1x8x1xf32>
    %46 = vector.shape_cast %45 : vector<1x8x1xf32> to vector<8x1xf32>
    %c0_24 = arith.constant 0 : index
    %c0_25 = arith.constant 0 : index
    %c1_26 = arith.constant 1 : index
    %47 = vector.load %arg4[%c0_24, %c0_25, %c1_26] : memref<1x8x2xf32, #tpu.memory_space<vmem>>, vector<1x8x1xf32>
    %48 = vector.shape_cast %47 : vector<1x8x1xf32> to vector<8x1xf32>
    %49 = vector.broadcast %46 : vector<8x1xf32> to vector<8x64xf32>
    %50 = vector.broadcast %40 : vector<1x64xf32> to vector<8x64xf32>
    %51 = arith.subf %49, %50 : vector<8x64xf32>
    %52 = math.absf %51 : vector<8x64xf32>
    %53 = vector.broadcast %48 : vector<8x1xf32> to vector<8x64xf32>
    %54 = vector.broadcast %44 : vector<1x64xf32> to vector<8x64xf32>
    %55 = arith.subf %53, %54 : vector<8x64xf32>
    %56 = math.absf %55 : vector<8x64xf32>
    %57 = arith.addf %52, %56 : vector<8x64xf32>
    %cst_27 = arith.constant 1.000000e+00 : f32
    %58 = vector.broadcast %cst_27 : f32 to vector<8x64xf32>
    %59 = arith.mulf %58, %32 : vector<8x64xf32>
    %cst_28 = arith.constant 1.000000e+00 : f32
    %60 = vector.broadcast %cst_28 : f32 to vector<8x64xf32>
    %61 = arith.mulf %60, %57 : vector<8x64xf32>
    %62 = arith.addf %59, %61 : vector<8x64xf32>
    %c0_29 = arith.constant 0 : index
    %c0_30 = arith.constant 0 : index
    %c0_31 = arith.constant 0 : index
    %63 = vector.load %arg7[%c0_29, %c0_30, %c0_31] : memref<1x1x64xf32, #tpu.memory_space<vmem>>, vector<1x1x64xf32>
    %64 = vector.shape_cast %63 : vector<1x1x64xf32> to vector<1x64xf32>
    %cst_32 = arith.constant 0.000000e+00 : f32
    %65 = vector.broadcast %cst_32 : f32 to vector<1x64xf32>
    %66 = arith.cmpf ole, %64, %65 : vector<1x64xf32>
    %cst_33 = arith.constant 1.000000e+09 : f32
    %67 = vector.shape_cast %66 : vector<1x64xi1> to vector<1x64xi1>
    %68 = vector.broadcast %67 : vector<1x64xi1> to vector<8x64xi1>
    %69 = vector.broadcast %cst_33 : f32 to vector<8x64xf32>
    %70 = arith.select %68, %69, %62 : vector<8x64xi1>, vector<8x64xf32>
    %c0_34 = arith.constant 0 : index
    %c0_35 = arith.constant 0 : index
    %c0_36 = arith.constant 0 : index
    %71 = vector.load %arg8[%c0_34, %c0_35, %c0_36] : memref<1x8x64xf32, #tpu.memory_space<vmem>>, vector<1x8x64xf32>
    %72 = vector.shape_cast %71 : vector<1x8x64xf32> to vector<8x64xf32>
    %73 = vector.shape_cast %70 : vector<8x64xf32> to vector<1x8x64xf32>
    tpu.vector_store %arg8[%c0_34, %c0_35, %c0_36], %73 {strides = array<i32>} : memref<1x8x64xf32, #tpu.memory_space<vmem>>, vector<1x8x64xf32>,
    return
  }
  func.func @transform_0(%arg0: i32, %arg1: i32) -> (i32, i32) {
    %c0_i32 = arith.constant 0 : i32
    %c0_i32_0 = arith.constant 0 : i32
    %c0_i32_1 = arith.constant 0 : i32
    return %c0_i32, %c0_i32_0 : i32, i32
  }
  func.func @transform_1(%arg0: i32, %arg1: i32) -> (i32, i32, i32) {
    %c0_i32 = arith.constant 0 : i32
    %c0_i32_0 = arith.constant 0 : i32
    %c0_i32_1 = arith.constant 0 : i32
    return %arg0, %c0_i32, %c0_i32_0 : i32, i32, i32
  }
  func.func @transform_2(%arg0: i32, %arg1: i32) -> (i32, i32, i32) {
    %c0_i32 = arith.constant 0 : i32
    %c0_i32_0 = arith.constant 0 : i32
    %c0_i32_1 = arith.constant 0 : i32
    return %arg0, %c0_i32, %c0_i32_0 : i32, i32, i32
  }
  func.func @transform_3(%arg0: i32, %arg1: i32) -> (i32, i32, i32) {
    %c0_i32 = arith.constant 0 : i32
    %c0_i32_0 = arith.constant 0 : i32
    return %arg0, %c0_i32, %arg1 : i32, i32, i32
  }
  func.func @transform_4(%arg0: i32, %arg1: i32) -> (i32, i32, i32) {
    %c0_i32 = arith.constant 0 : i32
    %c0_i32_0 = arith.constant 0 : i32
    return %arg0, %c0_i32, %arg1 : i32, i32, i32
  }
  func.func @transform_5(%arg0: i32, %arg1: i32) -> (i32, i32, i32) {
    %c0_i32 = arith.constant 0 : i32
    %c0_i32_0 = arith.constant 0 : i32
    return %arg0, %c0_i32, %arg1 : i32, i32, i32
  }
  func.func @transform_6(%arg0: i32, %arg1: i32) -> (i32, i32, i32) {
    %c0_i32 = arith.constant 0 : i32
    %c0_i32_0 = arith.constant 0 : i32
    return %arg0, %c0_i32, %arg1 : i32, i32, i32
  }
}

</mosaic_0001>

<llo_original>
// kernel: tpu_custom_call.1
$region0: #{tpu_custom_call.1}
  #allocation0 [shape = 'u32[]', space=smem, size = 0x4, offset = 0x4, fixed_abs, tag = 'smem constant byte address 0x4 - core index']
  #allocation1 [shape = 'u32[72,128]{1,0:T(1,128)}', space=vmem, size = 0x9000, scoped, tag = 'internal scratch']
  %s0 = inlined_call_operand.vmem [shape: f32[2,2], index: 0, kind: input, shape index: {}]
  %s1 = inlined_call_operand.vmem [shape: f32[2,8,4], index: 1, kind: input, shape index: {}]
  %s2 = inlined_call_operand.vmem [shape: f32[2,8,2], index: 2, kind: input, shape index: {}]
  %s3 = inlined_call_operand.vmem [shape: f32[2,4,64], index: 3, kind: input, shape index: {}]
  %s4 = inlined_call_operand.vmem [shape: f32[2,2,64], index: 4, kind: input, shape index: {}]
  %s5 = inlined_call_operand.vmem [shape: f32[2,1,64], index: 5, kind: input, shape index: {}]
  %s6 = inlined_call_operand.hbm [shape: f32[2,8,64], index: 6, kind: output, shape index: {}]
  %s7 = sld [smem:[#allocation0]]
  $region61: #{tpu_custom_call.1} parent=0
    _
  %s9 = ssub.s32 1, %s7
  %s10 = scalar_select 0, %s9, %s7
  $region1: #{tpu_custom_call.1} parent=0
    #allocation2 [shape = 'u8[1024]{0}', space=smem, size = 0x400, scoped, tag = 'input window, operand 0, single buffered']
    #allocation3 [shape = 's32[2]{0}', space=sflag, size = 0x8, scoped, tag = 'scoped memory for tpu_custom_call.1']
    #allocation4 [shape = 's32[2]{0}', space=sflag, size = 0x8, scoped, tag = 'scoped memory for tpu_custom_call.1']
    #allocation5 [shape = 'u8[8192]{0}', space=vmem, size = 0x2000, scoped, tag = 'output window, operand 0']
    %11 = vsyncpa [#allocation4], 0
    %12 = vsyncpa [#allocation3], 0
    %s13 = scalar_lea.sflag [#allocation3], 1
    %14 = vsyncpa %s13, 0
    loop: start=0, step=1, limit=4
    $region2: #{tpu_custom_call.1} parent=1 // loop_pre_header
      _
    $region3: #{tpu_custom_call.1} parent=1 // loop_header
      %s16 = sphi 0, %s20
      %p17 = scmp.ge.s32.totalorder %s16, 4
      %s23 = sphi 0, %s35
      %s24 = sphi 0, %s31
      %s25 = sphi 0, %s23
      %s26 = sphi 0, %s24
      %s27 = sphi 0, %s25
      %s28 = sphi 0, %s26
      %s36 = sphi 0, %s36
      %s38 = sphi 0, %s36
      %s39 = sphi 0, %s38
      %s53 = sphi 0, %s39
      %s59 = sphi 0, %s61
      %s62 = sphi 0, %s59
      %s63 = sphi 0, %s62
      %s79 = sphi 0, %s63
      %s85 = sphi 0, %s87
      %s88 = sphi 0, %s85
      %s89 = sphi 0, %s88
      %s105 = sphi 0, %s89
      %s113 = sphi 0, %s115
      %s116 = sphi 0, %s113
      %s117 = sphi 0, %s116
      %s133 = sphi 0, %s117
      %s141 = sphi 0, %s143
      %s144 = sphi 0, %s141
      %s145 = sphi 0, %s144
      %s161 = sphi 0, %s145
      %s169 = sphi 0, %s171
      %s172 = sphi 0, %s169
      %s173 = sphi 0, %s172
      %s189 = sphi 0, %s173
      %s197 = sphi 0, %s199
      %s200 = sphi 0, %s197
      %s201 = sphi 0, %s200
      %s217 = sphi 0, %s201
    $region4: #{tpu_custom_call.1} parent=1 // loop_header_branch
      %19 = sbr.rel (%p17) target = $region8
    $region5: #{tpu_custom_call.1} parent=1 // loop_body
      %s21 = ssub.s32 %s16, 1
      %s22 = ssub.s32 %s16, 2
      %s29 = sadd.s32 1, %s24
      %p30 = scmp.ge.s32.totalorder %s29, 1
      %s31 = scalar_select %p30, 0, %s29
      %s32 = sadd.s32 1, %s23
      %s33 = scalar_select %p30, %s32, %s23
      %p34 = scmp.ge.s32.totalorder %s33, 2
      %s35 = scalar_select %p34, 0, %s33
      %s37 = sadd.s32 %s36, 1
      %p40 = scmp.eq.s32.totalorder %s16, 1
      %p41 = scmp.ne.s32.totalorder %s36, %s38
      %p42 = scmp.eq.s32.totalorder %s16, 0
      %p43 = por %p41, %p42
      %p44 = scmp.ne.s32.totalorder %s36, %s38
      %p45 = scmp.eq.s32.totalorder %s21, 1
      %p46 = por %p44, %p45
      %p47 = scmp.ne.s32.totalorder %s38, %s39
      %p48 = scmp.eq.s32.totalorder %s21, 0
      %p49 = por %p47, %p48
      %p50 = scmp.ne.s32.totalorder %s38, %s39
      %p51 = scmp.eq.s32.totalorder %s22, 1
      %p52 = por %p50, %p51
      %p54 = scmp.ne.s32.totalorder %s39, %s53
      %p55 = scmp.eq.s32.totalorder %s22, 0
      %p56 = por %p54, %p55
      %s57 = ssub.s32 %s23, %s35
      %p58 = scmp.eq.s32.totalorder %s57, 0
      %s60 = sadd.s32 %s59, 1
      %s61 = scalar_select %p58, %s59, %s60
      %p64 = pneg %p58
      %p65 = scmp.eq.s32.totalorder %s16, 1
      %p66 = por %p64, %p65
      %p67 = scmp.ne.s32.totalorder %s59, %s62
      %p68 = scmp.eq.s32.totalorder %s16, 0
      %p69 = por %p67, %p68
      %p70 = scmp.ne.s32.totalorder %s59, %s62
      %p71 = scmp.eq.s32.totalorder %s21, 1
      %p72 = por %p70, %p71
      %p73 = scmp.ne.s32.totalorder %s62, %s63
      %p74 = scmp.eq.s32.totalorder %s21, 0
      %p75 = por %p73, %p74
      %p76 = scmp.ne.s32.totalorder %s62, %s63
      %p77 = scmp.eq.s32.totalorder %s22, 1
      %p78 = por %p76, %p77
      %p80 = scmp.ne.s32.totalorder %s63, %s79
      %p81 = scmp.eq.s32.totalorder %s22, 0
      %p82 = por %p80, %p81
      %s83 = ssub.s32 %s23, %s35
      %p84 = scmp.eq.s32.totalorder %s83, 0
      %s86 = sadd.s32 %s85, 1
      %s87 = scalar_select %p84, %s85, %s86
      %p90 = pneg %p84
      %p91 = scmp.eq.s32.totalorder %s16, 1
      %p92 = por %p90, %p91
      %p93 = scmp.ne.s32.totalorder %s85, %s88
      %p94 = scmp.eq.s32.totalorder %s16, 0
      %p95 = por %p93, %p94
      %p96 = scmp.ne.s32.totalorder %s85, %s88
      %p97 = scmp.eq.s32.totalorder %s21, 1
      %p98 = por %p96, %p97
      %p99 = scmp.ne.s32.totalorder %s88, %s89
      %p100 = scmp.eq.s32.totalorder %s21, 0
      %p101 = por %p99, %p100
      %p102 = scmp.ne.s32.totalorder %s88, %s89
      %p103 = scmp.eq.s32.totalorder %s22, 1
      %p104 = por %p102, %p103
      %p106 = scmp.ne.s32.totalorder %s89, %s105
      %p107 = scmp.eq.s32.totalorder %s22, 0
      %p108 = por %p106, %p107
      %s109 = ssub.s32 %s23, %s35
      %s110 = ssub.s32 %s24, %s31
      %s111 = sor.u32 %s109, %s110
      %p112 = scmp.eq.s32.totalorder %s111, 0
      %s114 = sadd.s32 %s113, 1
      %s115 = scalar_select %p112, %s113, %s114
      %p118 = pneg %p112
      %p119 = scmp.eq.s32.totalorder %s16, 1
      %p120 = por %p118, %p119
      %p121 = scmp.ne.s32.totalorder %s113, %s116
      %p122 = scmp.eq.s32.totalorder %s16, 0
      %p123 = por %p121, %p122
      %p124 = scmp.ne.s32.totalorder %s113, %s116
      %p125 = scmp.eq.s32.totalorder %s21, 1
      %p126 = por %p124, %p125
      %p127 = scmp.ne.s32.totalorder %s116, %s117
      %p128 = scmp.eq.s32.totalorder %s21, 0
      %p129 = por %p127, %p128
      %p130 = scmp.ne.s32.totalorder %s116, %s117
      %p131 = scmp.eq.s32.totalorder %s22, 1
      %p132 = por %p130, %p131
      %p134 = scmp.ne.s32.totalorder %s117, %s133
      %p135 = scmp.eq.s32.totalorder %s22, 0
      %p136 = por %p134, %p135
      %s137 = ssub.s32 %s23, %s35
      %s138 = ssub.s32 %s24, %s31
      %s139 = sor.u32 %s137, %s138
      %p140 = scmp.eq.s32.totalorder %s139, 0
      %s142 = sadd.s32 %s141, 1
      %s143 = scalar_select %p140, %s141, %s142
      %p146 = pneg %p140
      %p147 = scmp.eq.s32.totalorder %s16, 1
      %p148 = por %p146, %p147
      %p149 = scmp.ne.s32.totalorder %s141, %s144
      %p150 = scmp.eq.s32.totalorder %s16, 0
      %p151 = por %p149, %p150
      %p152 = scmp.ne.s32.totalorder %s141, %s144
      %p153 = scmp.eq.s32.totalorder %s21, 1
      %p154 = por %p152, %p153
      %p155 = scmp.ne.s32.totalorder %s144, %s145
      %p156 = scmp.eq.s32.totalorder %s21, 0
      %p157 = por %p155, %p156
      %p158 = scmp.ne.s32.totalorder %s144, %s145
      %p159 = scmp.eq.s32.totalorder %s22, 1
      %p160 = por %p158, %p159
      %p162 = scmp.ne.s32.totalorder %s145, %s161
      %p163 = scmp.eq.s32.totalorder %s22, 0
      %p164 = por %p162, %p163
      %s165 = ssub.s32 %s23, %s35
      %s166 = ssub.s32 %s24, %s31
      %s167 = sor.u32 %s165, %s166
      %p168 = scmp.eq.s32.totalorder %s167, 0
      %s170 = sadd.s32 %s169, 1
      %s171 = scalar_select %p168, %s169, %s170
      %p174 = pneg %p168
      %p175 = scmp.eq.s32.totalorder %s16, 1
      %p176 = por %p174, %p175
      %p177 = scmp.ne.s32.totalorder %s169, %s172
      %p178 = scmp.eq.s32.totalorder %s16, 0
      %p179 = por %p177, %p178
      %p180 = scmp.ne.s32.totalorder %s169, %s172
      %p181 = scmp.eq.s32.totalorder %s21, 1
      %p182 = por %p180, %p181
      %p183 = scmp.ne.s32.totalorder %s172, %s173
      %p184 = scmp.eq.s32.totalorder %s21, 0
      %p185 = por %p183, %p184
      %p186 = scmp.ne.s32.totalorder %s172, %s173
      %p187 = scmp.eq.s32.totalorder %s22, 1
      %p188 = por %p186, %p187
      %p190 = scmp.ne.s32.totalorder %s173, %s189
      %p191 = scmp.eq.s32.totalorder %s22, 0
      %p192 = por %p190, %p191
      %s193 = ssub.s32 %s23, %s35
      %s194 = ssub.s32 %s24, %s31
      %s195 = sor.u32 %s193, %s194
      %p196 = scmp.eq.s32.totalorder %s195, 0
      %s198 = sadd.s32 %s197, 1
      %s199 = scalar_select %p196, %s197, %s198
      %p202 = pneg %p196
      %p203 = scmp.eq.s32.totalorder %s16, 1
      %p204 = por %p202, %p203
      %p205 = scmp.ne.s32.totalorder %s197, %s200
      %p206 = scmp.eq.s32.totalorder %s16, 0
      %p207 = por %p205, %p206
      %p208 = scmp.ne.s32.totalorder %s197, %s200
      %p209 = scmp.eq.s32.totalorder %s21, 1
      %p210 = por %p208, %p209
      %p211 = scmp.ne.s32.totalorder %s200, %s201
      %p212 = scmp.eq.s32.totalorder %s21, 0
      %p213 = por %p211, %p212
      %p214 = scmp.ne.s32.totalorder %s200, %s201
      %p215 = scmp.eq.s32.totalorder %s22, 1
      %p216 = por %p214, %p215
      %p218 = scmp.ne.s32.totalorder %s201, %s217
      %p219 = scmp.eq.s32.totalorder %s22, 0
      %p220 = por %p218, %p219
      %p221 = scmp.le.s32.totalorder 1, %s16
      %p222 = scmp.lt.s32.totalorder %s16, 3
      %p223 = pnand %p221, %p222
      %p224 = pneg %p223
      // Predicated region
      $region9: #{tpu_custom_call.1} parent=5 // pred_check
        _
      $region10: #{tpu_custom_call.1} parent=5 // pred_check_branch
        %226 = sbr.rel (%p223) target = $region12
      $region11: #{tpu_custom_call.1} parent=5 // pred_region
        %s227 = ssub.s32 %s16, 1
        // Predicated region
        $region13: #{tpu_custom_call.1} parent=11 // pred_check
          %p228 = pneg %p49
        $region14: #{tpu_custom_call.1} parent=11 // pred_check_branch
          %230 = sbr.rel (%p228) target = $region16
        $region15: #{tpu_custom_call.1} parent=11 // pred_region
          %232 = vsyncadd [#allocation4], 0
          %s234 = sshll.u32 %s0, 4
          %s235 = int_to_ptr.vmem [resolvable:$true] %s234
          %237 = dma.vmem_to_smem %s235, 32, [#allocation2], [#allocation4]
        $region16: #{tpu_custom_call.1} parent=11 // pred_fallthru
          _
      $region12: #{tpu_custom_call.1} parent=5 // pred_fallthru
        _
      %p238 = scmp.lt.s32.totalorder %s16, 2
      // Predicated region
      $region17: #{tpu_custom_call.1} parent=5 // pred_check
        %p239 = pneg %p238
      $region18: #{tpu_custom_call.1} parent=5 // pred_check_branch
        %241 = sbr.rel (%p239) target = $region20
      $region19: #{tpu_custom_call.1} parent=5 // pred_region
        // Predicated region
        $region21: #{tpu_custom_call.1} parent=19 // pred_check
          %p242 = pneg %p69
        $region22: #{tpu_custom_call.1} parent=19 // pred_check_branch
          %244 = sbr.rel (%p242) target = $region24
        $region23: #{tpu_custom_call.1} parent=19 // pred_region
          %p245 = scmp.lt.s32.totalorder %s23, 1
          %s246 = scalar_select %p245, %s23, 1
          %s247 = smul.addr %s246, 8
          %s248 = scalar_lea.vmem %s1, %s247
        $region24: #{tpu_custom_call.1} parent=19 // pred_fallthru
          _
        // Predicated region
        $region25: #{tpu_custom_call.1} parent=19 // pred_check
          %p249 = pneg %p95
        $region26: #{tpu_custom_call.1} parent=19 // pred_check_branch
          %251 = sbr.rel (%p249) target = $region28
        $region27: #{tpu_custom_call.1} parent=19 // pred_region
          %p252 = scmp.lt.s32.totalorder %s23, 1
          %s253 = scalar_select %p252, %s23, 1
          %s254 = smul.addr %s253, 8
          %s255 = scalar_lea.vmem %s2, %s254
        $region28: #{tpu_custom_call.1} parent=19 // pred_fallthru
          _
        // Predicated region
        $region29: #{tpu_custom_call.1} parent=19 // pred_check
          %p256 = pneg %p123
        $region30: #{tpu_custom_call.1} parent=19 // pred_check_branch
          %258 = sbr.rel (%p256) target = $region32
        $region31: #{tpu_custom_call.1} parent=19 // pred_region
          %p259 = scmp.lt.s32.totalorder %s23, 1
          %s260 = scalar_select %p259, %s23, 1
          %p261 = scmp.lt.s32.totalorder %s24, 0
          %s262 = scalar_select %p261, %s24, 0
          %s263 = sadd.s32 %s262, %s260
          %s264 = smul.addr %s263, 4
          %s265 = scalar_lea.vmem %s3, %s264
        $region32: #{tpu_custom_call.1} parent=19 // pred_fallthru
          _
        // Predicated region
        $region33: #{tpu_custom_call.1} parent=19 // pred_check
          %p266 = pneg %p151
        $region34: #{tpu_custom_call.1} parent=19 // pred_check_branch
          %268 = sbr.rel (%p266) target = $region36
        $region35: #{tpu_custom_call.1} parent=19 // pred_region
          %p269 = scmp.lt.s32.totalorder %s23, 1
          %s270 = scalar_select %p269, %s23, 1
          %p271 = scmp.lt.s32.totalorder %s24, 0
          %s272 = scalar_select %p271, %s24, 0
          %s273 = sadd.s32 %s272, %s270
          %s274 = smul.addr %s273, 2
          %s275 = scalar_lea.vmem %s4, %s274
        $region36: #{tpu_custom_call.1} parent=19 // pred_fallthru
          _
        // Predicated region
        $region37: #{tpu_custom_call.1} parent=19 // pred_check
          %p276 = pneg %p179
        $region38: #{tpu_custom_call.1} parent=19 // pred_check_branch
          %278 = sbr.rel (%p276) target = $region40
        $region39: #{tpu_custom_call.1} parent=19 // pred_region
          %p279 = scmp.lt.s32.totalorder %s23, 1
          %s280 = scalar_select %p279, %s23, 1
          %p281 = scmp.lt.s32.totalorder %s24, 0
          %s282 = scalar_select %p281, %s24, 0
          %s283 = sadd.s32 %s282, %s280
          %s284 = scalar_lea.vmem %s5, %s283
        $region40: #{tpu_custom_call.1} parent=19 // pred_fallthru
          _
      $region20: #{tpu_custom_call.1} parent=5 // pred_fallthru
        _
      %p285 = scmp.le.s32.totalorder 1, %s16
      %p286 = scmp.lt.s32.totalorder %s16, 3
      %p287 = pnand %p285, %p286
      %p288 = pneg %p287
      // Predicated region
      $region41: #{tpu_custom_call.1} parent=5 // pred_check
        _
      $region42: #{tpu_custom_call.1} parent=5 // pred_check_branch
        %290 = sbr.rel (%p287) target = $region44
      $region43: #{tpu_custom_call.1} parent=5 // pred_region
        %s291 = ssub.s32 %s16, 1
        // Predicated region
        $region45: #{tpu_custom_call.1} parent=43 // pred_check
          %p292 = pneg %p49
        $region46: #{tpu_custom_call.1} parent=43 // pred_check_branch
          %294 = sbr.rel (%p292) target = $region48
        $region47: #{tpu_custom_call.1} parent=43 // pred_region
          %296 = dma.done [#allocation4], 32
        $region48: #{tpu_custom_call.1} parent=43 // pred_fallthru
          _
        %297 = sfence
        %p298 = pneg %p49
        %p299 = pneg %p46
        %p300 = scmp.lt.s32.totalorder %s25, 1
        %s301 = scalar_select %p300, %s25, 1
        %s302 = smul.addr %s301, 8
        %s303 = scalar_lea.vmem %s1, %s302
        %p304 = pneg %p75
        %p305 = pneg %p72
        %p306 = scmp.lt.s32.totalorder %s25, 1
        %s307 = scalar_select %p306, %s25, 1
        %s308 = smul.addr %s307, 8
        %s309 = scalar_lea.vmem %s2, %s308
        %p310 = pneg %p101
        %p311 = pneg %p98
        %p312 = scmp.lt.s32.totalorder %s25, 1
        %s313 = scalar_select %p312, %s25, 1
        %p314 = scmp.lt.s32.totalorder %s26, 0
        %s315 = scalar_select %p314, %s26, 0
        %s316 = sadd.s32 %s315, %s313
        %s317 = smul.addr %s316, 4
        %s318 = scalar_lea.vmem %s3, %s317
        %p319 = pneg %p129
        %p320 = pneg %p126
        %p321 = scmp.lt.s32.totalorder %s25, 1
        %s322 = scalar_select %p321, %s25, 1
        %p323 = scmp.lt.s32.totalorder %s26, 0
        %s324 = scalar_select %p323, %s26, 0
        %s325 = sadd.s32 %s324, %s322
        %s326 = smul.addr %s325, 2
        %s327 = scalar_lea.vmem %s4, %s326
        %p328 = pneg %p157
        %p329 = pneg %p154
        %p330 = scmp.lt.s32.totalorder %s25, 1
        %s331 = scalar_select %p330, %s25, 1
        %p332 = scmp.lt.s32.totalorder %s26, 0
        %s333 = scalar_select %p332, %s26, 0
        %s334 = sadd.s32 %s333, %s331
        %s335 = scalar_lea.vmem %s5, %s334
        %p336 = pneg %p185
        %p337 = pneg %p182
        %p338 = pneg %p213
        %p339 = pneg %p210
        %s340 = sand.u32 %s200, 1
        %s341 = scalar_lea.sflag [#allocation3], %s340
        %s342 = sand.u32 %s200, 1
        %s343 = smul.addr %s342, 8
        %s344 = scalar_lea.vmem [#allocation5], %s343
        %p345 = scmp.lt.s32.totalorder %s25, 1
        %s346 = scalar_select %p345, %s25, 1
        %s347 = smul.addr %s346, 8
        %s348 = scalar_lea.vmem %s1, %s347
        %p349 = scmp.lt.s32.totalorder %s25, 1
        %s350 = scalar_select %p349, %s25, 1
        %s351 = smul.addr %s350, 8
        %s352 = scalar_lea.vmem %s2, %s351
        %p353 = scmp.lt.s32.totalorder %s25, 1
        %s354 = scalar_select %p353, %s25, 1
        %p355 = scmp.lt.s32.totalorder %s26, 0
        %s356 = scalar_select %p355, %s26, 0
        %s357 = sadd.s32 %s356, %s354
        %s358 = smul.addr %s357, 4
        %s359 = scalar_lea.vmem %s3, %s358
        %p360 = scmp.lt.s32.totalorder %s25, 1
        %s361 = scalar_select %p360, %s25, 1
        %p362 = scmp.lt.s32.totalorder %s26, 0
        %s363 = scalar_select %p362, %s26, 0
        %s364 = sadd.s32 %s363, %s361
        %s365 = smul.addr %s364, 2
        %s366 = scalar_lea.vmem %s4, %s365
        %p367 = scmp.lt.s32.totalorder %s25, 1
        %s368 = scalar_select %p367, %s25, 1
        %p369 = scmp.lt.s32.totalorder %s26, 0
        %s370 = scalar_select %p369, %s26, 0
        %s371 = sadd.s32 %s370, %s368
        %s372 = scalar_lea.vmem %s5, %s371
        %v373 = vld [vmem:[%s359] sm:$0xf]
        %v374 = vxor.u32 %v373, 2147483648
        %v375 = vmul.f32 %v374, 1.442695
        %v376 = vpow.pop %v375
        %v377 = vadd.f32 %v376, 1.0
        %v378 = vrcp.pop %v377
        %v379 = vmul.f32 %v377, %v378
        %v380 = vsub.f32 1.0, %v379
        %v381 = vmul.f32 %v378, %v380
        %v382 = vadd.f32 %v378, %v381
        %vm383 = vweird.f32 %v377
        %vm384 = vweird.f32 %v378
        %vm385 = vmor %vm383, %vm384
        %v386 = vsel %vm385, %v378, %v382
        %v387 = vand.u32 2147483647, %v377
        %vm388 = vcmp.eq.f32.partialorder %v387, 8.507059e+37
        %v389 = vand.u32 %v377, 2147483648
        %v390 = vor.u32 1.1754944e-38, %v389
        %v391 = vsel %vm388, %v390, %v386
        %v392 = vmul.f32 1.0, %v391
        %v393 = vadd.f32 %v392, 1e-08
        %v394 = vlog2.pop %v393
        %v395 = vmul.f32 %v394, 0.6931472
        %v396 = vsub.f32 %v395, %v373
        %v397 = vmax.f32 %v396, -18.420681
        %v398 = vmul.f32 %v392, %v392
        %v399 = vsub.f32 1.0, %v392
        %v400 = vmul.f32 %v399, %v399
        %v401 = vmul.f32 %v398, 0.75
        %v402 = vsub.f32 0.0, %v397
        %v403 = vmul.f32 %v401, %v402
        %v404 = vmul.f32 %v400, 0.25
        %v405 = vsub.f32 0.0, %v395
        %v406 = vmul.f32 %v404, %v405
        %v407 = vsub.f32 %v406, %v403
        %v408 = vld [vmem:[%s348] sm:$0xff]
        %s409 = smul.u32 %s25, 128
        %s410 = sld [smem:[#allocation2 + %s409]]
        %s411 = sadd.s32 %s409, 1
        %s412 = sld [smem:[#allocation2 + %s411]]
        %v413 = vld [vmem:[%s366] sm:$0x1]
        %v414 = vstv %s410
        %v415 = vmul.f32 %v413, %v414
        %v416 = vld [vmem:[%s366 + $0x1] sm:$0x1]
        %v417 = vstv %s412
        %v418 = vmul.f32 %v416, %v417
        %v419 = vld [vmem:[%s352] sm:$0xff]
        %421 = vset.pattern.permute.xlu0 0
        %422 = vperm.xlu0 %421, %v419
        %v423 = vpop.permute.xlu0 %422
        %v425 = vperm.slane %v415, 0
        %v426 = vsub.f32 %v423, %v425
        %v427 = vand.u32 2147483647, %v426
        %428 = vset.pattern.permute.xlu0 1
        %429 = vperm.xlu0 %428, %v419
        %v430 = vpop.permute.xlu0 %429
        %v432 = vperm.slane %v418, 0
        %v433 = vsub.f32 %v430, %v432
        %v434 = vand.u32 2147483647, %v433
        %v435 = vadd.f32 %v427, %v434
        %vm436 = vcmask 31744
        %v438 = vsel %vm436, %v408, 0
        %vm440 = vcmask 1043456
        %v442 = vsel %vm440, %v407, 0
        %444 = vmatpush.msra.mxu0 0.0
        %445 = vmatpush.msra.mxu0 0.0
        %446 = vmatpush.msra.mxu0 0.0
        %447 = vmatpush.msra.mxu0 0.0
        %448 = vmatpush.msra.mxu0 0.0
        %449 = vmatpush.msra.mxu0 0.0
        %450 = vmatpush.msra.mxu0 0.0
        %451 = vmatpush.msra.mxu0 0.0
        %452 = vmatpush.msra.mxu0 0.0
        %453 = vmatpush.msra.mxu0 0.0
        %454 = vmatpush.msra.mxu0 0.0
        %455 = vmatpush.msra.mxu0 0.0
        %456 = vmatpush.msra.mxu0 0.0
        %457 = vmatpush.msra.mxu0 0.0
        %458 = vmatpush.msra.mxu0 0.0
        %v459 = vand.u32 %v442, 4294901760
        %460 = vmatpush.msra.mxu0 %v459
        %v461 = vand.u32 %v438, 4294901760
        %v462 = vsub.f32 %v438, %v461
        %v463 = vand.u32 %v462, 4294901760
        %v464 = vsub.f32 %v462, %v463
        %v465 = vand.u32 %v464, 4294901760
        %466 = vmatmul.f32.gmra.mxu0 %v465
        %v467 = vpop.f32.mrf.mxu0
        %v468 = vadd.f32 %v435, %v467
        %469 = vdwg.mxu0
        %470 = vmatpush.msra.mxu0 0.0
        %471 = vmatpush.msra.mxu0 0.0
        %472 = vmatpush.msra.mxu0 0.0
        %473 = vmatpush.msra.mxu0 0.0
        %474 = vmatpush.msra.mxu0 0.0
        %475 = vmatpush.msra.mxu0 0.0
        %476 = vmatpush.msra.mxu0 0.0
        %477 = vmatpush.msra.mxu0 0.0
        %478 = vmatpush.msra.mxu0 0.0
        %479 = vmatpush.msra.mxu0 0.0
        %480 = vmatpush.msra.mxu0 0.0
        %481 = vmatpush.msra.mxu0 0.0
        %482 = vmatpush.msra.mxu0 0.0
        %483 = vmatpush.msra.mxu0 0.0
        %484 = vmatpush.msra.mxu0 0.0
        %v485 = vand.u32 %v442, 4294901760
        %v486 = vsub.f32 %v442, %v485
        %v487 = vand.u32 %v486, 4294901760
        %v488 = vsub.f32 %v486, %v487
        %v489 = vand.u32 %v488, 4294901760
        %490 = vmatpush.msra.mxu0 %v489
        %v491 = vand.u32 %v438, 4294901760
        %492 = vmatmul.f32.gmra.mxu0 %v491
        %v493 = vpop.f32.mrf.mxu0
        %v494 = vadd.f32 %v468, %v493
        %495 = vdwg.mxu0
        %496 = vmatpush.msra.mxu0 0.0
        %497 = vmatpush.msra.mxu0 0.0
        %498 = vmatpush.msra.mxu0 0.0
        %499 = vmatpush.msra.mxu0 0.0
        %500 = vmatpush.msra.mxu0 0.0
        %501 = vmatpush.msra.mxu0 0.0
        %502 = vmatpush.msra.mxu0 0.0
        %503 = vmatpush.msra.mxu0 0.0
        %504 = vmatpush.msra.mxu0 0.0
        %505 = vmatpush.msra.mxu0 0.0
        %506 = vmatpush.msra.mxu0 0.0
        %507 = vmatpush.msra.mxu0 0.0
        %508 = vmatpush.msra.mxu0 0.0
        %509 = vmatpush.msra.mxu0 0.0
        %510 = vmatpush.msra.mxu0 0.0
        %v511 = vand.u32 %v442, 4294901760
        %v512 = vsub.f32 %v442, %v511
        %513 = vmatpush.msra.mxu0 %v512
        %v514 = vand.u32 %v438, 4294901760
        %v515 = vsub.f32 %v438, %v514
        %516 = vmatmul.f32.gmra.mxu0 %v515
        %v517 = vpop.f32.mrf.mxu0
        %v518 = vadd.f32 %v494, %v517
        %519 = vdwg.mxu0
        %520 = vmatpush.msra.mxu0 0.0
        %521 = vmatpush.msra.mxu0 0.0
        %522 = vmatpush.msra.mxu0 0.0
        %523 = vmatpush.msra.mxu0 0.0
        %524 = vmatpush.msra.mxu0 0.0
        %525 = vmatpush.msra.mxu0 0.0
        %526 = vmatpush.msra.mxu0 0.0
        %527 = vmatpush.msra.mxu0 0.0
        %528 = vmatpush.msra.mxu0 0.0
        %529 = vmatpush.msra.mxu0 0.0
        %530 = vmatpush.msra.mxu0 0.0
        %531 = vmatpush.msra.mxu0 0.0
        %532 = vmatpush.msra.mxu0 0.0
        %533 = vmatpush.msra.mxu0 0.0
        %534 = vmatpush.msra.mxu0 0.0
        %v535 = vand.u32 %v442, 4294901760
        %536 = vmatpush.msra.mxu0 %v535
        %v537 = vand.u32 %v438, 4294901760
        %v538 = vsub.f32 %v438, %v537
        %v539 = vand.u32 %v538, 4294901760
        %540 = vmatmul.f32.gmra.mxu0 %v539
        %v541 = vpop.f32.mrf.mxu0
        %v542 = vadd.f32 %v518, %v541
        %543 = vdwg.mxu0
        %544 = vmatpush.msra.mxu0 0.0
        %545 = vmatpush.msra.mxu0 0.0
        %546 = vmatpush.msra.mxu0 0.0
        %547 = vmatpush.msra.mxu0 0.0
        %548 = vmatpush.msra.mxu0 0.0
        %549 = vmatpush.msra.mxu0 0.0
        %550 = vmatpush.msra.mxu0 0.0
        %551 = vmatpush.msra.mxu0 0.0
        %552 = vmatpush.msra.mxu0 0.0
        %553 = vmatpush.msra.mxu0 0.0
        %554 = vmatpush.msra.mxu0 0.0
        %555 = vmatpush.msra.mxu0 0.0
        %556 = vmatpush.msra.mxu0 0.0
        %557 = vmatpush.msra.mxu0 0.0
        %558 = vmatpush.msra.mxu0 0.0
        %v559 = vand.u32 %v442, 4294901760
        %v560 = vsub.f32 %v442, %v559
        %v561 = vand.u32 %v560, 4294901760
        %562 = vmatpush.msra.mxu0 %v561
        %v563 = vand.u32 %v438, 4294901760
        %564 = vmatmul.f32.gmra.mxu0 %v563
        %v565 = vpop.f32.mrf.mxu0
        %v566 = vadd.f32 %v542, %v565
        %567 = vdwg.mxu0
        %568 = vmatpush.msra.mxu0 0.0
        %569 = vmatpush.msra.mxu0 0.0
        %570 = vmatpush.msra.mxu0 0.0
        %571 = vmatpush.msra.mxu0 0.0
        %572 = vmatpush.msra.mxu0 0.0
        %573 = vmatpush.msra.mxu0 0.0
        %574 = vmatpush.msra.mxu0 0.0
        %575 = vmatpush.msra.mxu0 0.0
        %576 = vmatpush.msra.mxu0 0.0
        %577 = vmatpush.msra.mxu0 0.0
        %578 = vmatpush.msra.mxu0 0.0
        %579 = vmatpush.msra.mxu0 0.0
        %580 = vmatpush.msra.mxu0 0.0
        %581 = vmatpush.msra.mxu0 0.0
        %582 = vmatpush.msra.mxu0 0.0
        %v583 = vand.u32 %v442, 4294901760
        %584 = vmatpush.msra.mxu0 %v583
        %v585 = vand.u32 %v438, 4294901760
        %586 = vmatmul.f32.gmra.mxu0 %v585
        %v587 = vpop.f32.mrf.mxu0
        %v588 = vadd.f32 %v566, %v587
        %589 = vdwg.mxu0
        %v590 = vld [vmem:[%s372] sm:$0x1]
        %vm591 = vcmp.le.f32.partialorder %v590, 0.0
        %v592 = vsel %vm591, 1, 0
        %v593 = vperm.slane %v592, 0
        %vm594 = vcmp.eq.s32.totalorder %v593, 1
        %v595 = vsel %vm594, 1e+09, %v588
        %vm596 = vcmask 523264
        %597 = vst.msk [vmem:[%s344] sm:$0xff] %vm596, %v595
        %s598 = sand.u32 %s200, 1
        %s599 = scalar_lea.sflag [#allocation3], %s598
        %s600 = sand.u32 %s200, 1
        %s601 = smul.addr %s600, 8
        %s602 = scalar_lea.vmem [#allocation5], %s601
        // Predicated region
        $region49: #{tpu_custom_call.1} parent=43 // pred_check
          %p603 = pneg %p210
        $region50: #{tpu_custom_call.1} parent=43 // pred_check_branch
          %605 = sbr.rel (%p603) target = $region52
        $region51: #{tpu_custom_call.1} parent=43 // pred_region
          %607 = vsyncadd %s599, 0
          %s608 = sadd.s32 %s26, %s25
          %s609 = smul.addr %s608, 8
          %s610 = scalar_lea.hbm %s6, %s609
          %s612 = sshll.u32 %s602, 4
          %s613 = int_to_ptr.vmem [resolvable:$true] %s612
          %s614 = sshll.u32 %s610, 4
          %s615 = int_to_ptr.hbm [resolvable:$true] %s614
          %617 = dma.vmem_to_hbm [thread:$0]  %s613, 128, %s615, %s599
        $region52: #{tpu_custom_call.1} parent=43 // pred_fallthru
          _
      $region44: #{tpu_custom_call.1} parent=5 // pred_fallthru
        _
      %p618 = scmp.le.s32.totalorder 2, %s16
      // Predicated region
      $region53: #{tpu_custom_call.1} parent=5 // pred_check
        %p619 = pneg %p618
      $region54: #{tpu_custom_call.1} parent=5 // pred_check_branch
        %621 = sbr.rel (%p619) target = $region56
      $region55: #{tpu_custom_call.1} parent=5 // pred_region
        %s622 = ssub.s32 %s16, 2
        // Predicated region
        $region57: #{tpu_custom_call.1} parent=55 // pred_check
          %p623 = pneg %p216
        $region58: #{tpu_custom_call.1} parent=55 // pred_check_branch
          %625 = sbr.rel (%p623) target = $region60
        $region59: #{tpu_custom_call.1} parent=55 // pred_region
          %s626 = sand.u32 %s201, 1
          %s627 = scalar_lea.sflag [#allocation3], %s626
          %s628 = sand.u32 %s201, 1
          %s629 = smul.addr %s628, 8
          %s630 = scalar_lea.vmem [#allocation5], %s629
          %632 = dma.done %s627, 128
        $region60: #{tpu_custom_call.1} parent=55 // pred_fallthru
          _
      $region56: #{tpu_custom_call.1} parent=5 // pred_fallthru
        _
    $region6: #{tpu_custom_call.1} parent=1 // loop_footer
      %s20 = sadd.s32 1, %s16
    $region7: #{tpu_custom_call.1} parent=1 // loop_footer_branch
      %15 = sbr.rel target = $region3
    $region8: #{tpu_custom_call.1} parent=1 // loop_exit
      _
    %633 = vsyncpa [#allocation3], 1
    %s634 = scalar_lea.sflag [#allocation3], 1
    %635 = vsyncpa %s634, 1
    %636 = vsyncpa [#allocation4], 1
    %s637 = scalar_lea.sflag [#allocation4], 1
    %638 = vsyncpa %s637, 1

</llo_original>
